<compile_context>
chip_gen: v5e
topology: v5e:2x2
jax: 0.10.0
libtpu: 0.0.40
codegen_flags: <defaults>
</compile_context>

<pallas_src>
import functools

import jax
import jax.numpy as jnp
from jax.experimental import pallas as pl
from jax.experimental.pallas import tpu as pltpu

_MATMUL_TM = 512    # row tile for conv-as-matmul kernels
_ELTWISE_TM = 1024  # row tile for elementwise BN kernels


def _row_tile(m, cap):
    # Single block covering all rows when it fits (block == full array dim is
    # always layout-legal); otherwise a large multiple-of-8 tile with a ragged
    # (masked where needed) tail block.
    return m if m <= cap else cap


# ----------------------------- Pallas kernels ------------------------------

def _conv_stats_kernel(a_ref, w_ref, o_ref, s_ref, q_ref, *, m_total, tm):
    # conv-as-matmul tile on the MXU + fused per-channel sum / sum-of-squares
    # epilogue (accumulated across the row-tile grid axis).
    @pl.when(pl.program_id(0) == 0)
    def _():
        s_ref[...] = jnp.zeros_like(s_ref)
        q_ref[...] = jnp.zeros_like(q_ref)

    y = jnp.dot(a_ref[...], w_ref[...], preferred_element_type=jnp.float32)
    o_ref[...] = y

    if m_total % tm != 0:
        # static branch: mask ragged tail rows so OOB garbage can't pollute stats
        row = (jax.lax.broadcasted_iota(jnp.int32, y.shape, 0)
               + pl.program_id(0) * tm)
        y = jnp.where(row < m_total, y, 0.0)

    s_ref[...] += jnp.sum(y, axis=0, keepdims=True)
    q_ref[...] += jnp.sum(y * y, axis=0, keepdims=True)


def _bn_relu_kernel(x_ref, scale_ref, shift_ref, o_ref):
    # fused batchnorm (folded into scale/shift) + ReLU, no residual stream
    o_ref[...] = jnp.maximum(x_ref[...] * scale_ref[...] + shift_ref[...], 0.0)


def _bn_add_relu_kernel(x_ref, scale_ref, shift_ref, r_ref, o_ref):
    # fused batchnorm + identity-residual add + ReLU
    o_ref[...] = jnp.maximum(
        x_ref[...] * scale_ref[...] + shift_ref[...] + r_ref[...], 0.0)


def _bn_conv_add_relu_kernel(x_ref, scale_ref, shift_ref,
                             xs_ref, w_ref, b_ref, o_ref):
    # fused batchnorm + projected-residual (1x1 conv = matmul + bias) add + ReLU:
    # the projected residual never touches HBM.
    res = jnp.dot(xs_ref[...], w_ref[...],
                  preferred_element_type=jnp.float32) + b_ref[...]
    o_ref[...] = jnp.maximum(
        x_ref[...] * scale_ref[...] + shift_ref[...] + res, 0.0)


# ------------------------------ Pallas wrappers -----------------------------

def conv2d_matmul_stats(a, w):
    """(M,K) @ (K,C) plus fused per-channel mean/var (biased, training mode)."""
    M, K = a.shape
    C = w.shape[1]
    tm = _row_tile(M, _MATMUL_TM)
    y, s, q = pl.pallas_call(
        functools.partial(_conv_stats_kernel, m_total=M, tm=tm),
        out_shape=(jax.ShapeDtypeStruct((M, C), jnp.float32),
                   jax.ShapeDtypeStruct((1, C), jnp.float32),
                   jax.ShapeDtypeStruct((1, C), jnp.float32)),
        grid=(pl.cdiv(M, tm),),
        in_specs=[pl.BlockSpec((tm, K), lambda i: (i, 0)),
                  pl.BlockSpec((K, C), lambda i: (0, 0))],
        out_specs=(pl.BlockSpec((tm, C), lambda i: (i, 0)),
                   pl.BlockSpec((1, C), lambda i: (0, 0)),
                   pl.BlockSpec((1, C), lambda i: (0, 0))),
        compiler_params=pltpu.CompilerParams(
            dimension_semantics=("arbitrary",)),   # stats accumulate across tiles
    )(a, w)
    mean = s[0] / M
    var = q[0] / M - mean * mean
    return y, mean, var


def bn_relu(x, scale, shift):
    M, C = x.shape
    tm = _row_tile(M, _ELTWISE_TM)
    return pl.pallas_call(
        _bn_relu_kernel,
        out_shape=jax.ShapeDtypeStruct((M, C), jnp.float32),
        grid=(pl.cdiv(M, tm),),
        in_specs=[pl.BlockSpec((tm, C), lambda i: (i, 0)),
                  pl.BlockSpec((1, C), lambda i: (0, 0)),
                  pl.BlockSpec((1, C), lambda i: (0, 0))],
        out_specs=pl.BlockSpec((tm, C), lambda i: (i, 0)),
        compiler_params=pltpu.CompilerParams(
            dimension_semantics=("parallel",)),
    )(x, scale.reshape(1, C), shift.reshape(1, C))


def bn_add_relu(x, scale, shift, residual):
    M, C = x.shape
    tm = _row_tile(M, _ELTWISE_TM)
    return pl.pallas_call(
        _bn_add_relu_kernel,
        out_shape=jax.ShapeDtypeStruct((M, C), jnp.float32),
        grid=(pl.cdiv(M, tm),),
        in_specs=[pl.BlockSpec((tm, C), lambda i: (i, 0)),
                  pl.BlockSpec((1, C), lambda i: (0, 0)),
                  pl.BlockSpec((1, C), lambda i: (0, 0)),
                  pl.BlockSpec((tm, C), lambda i: (i, 0))],
        out_specs=pl.BlockSpec((tm, C), lambda i: (i, 0)),
        compiler_params=pltpu.CompilerParams(
            dimension_semantics=("parallel",)),
    )(x, scale.reshape(1, C), shift.reshape(1, C), residual)


def bn_conv_add_relu(x, scale, shift, xs, w3, b3):
    """relu(x*scale + shift + xs @ w3 + b3) in one pass (projected residual)."""
    M, C = x.shape
    K = xs.shape[1]
    tm = _row_tile(M, _MATMUL_TM)
    return pl.pallas_call(
        _bn_conv_add_relu_kernel,
        out_shape=jax.ShapeDtypeStruct((M, C), jnp.float32),
        grid=(pl.cdiv(M, tm),),
        in_specs=[pl.BlockSpec((tm, C), lambda i: (i, 0)),
                  pl.BlockSpec((1, C), lambda i: (0, 0)),
                  pl.BlockSpec((1, C), lambda i: (0, 0)),
                  pl.BlockSpec((tm, K), lambda i: (i, 0)),
                  pl.BlockSpec((K, C), lambda i: (0, 0)),
                  pl.BlockSpec((1, C), lambda i: (0, 0))],
        out_specs=pl.BlockSpec((tm, C), lambda i: (i, 0)),
        compiler_params=pltpu.CompilerParams(
            dimension_semantics=("parallel",)),
    )(x, scale.reshape(1, C), shift.reshape(1, C), xs, w3, b3.reshape(1, C))


# ------------------------------ glue (plain JAX) ----------------------------

def im2col(x_nhwc, ksize, stride, padding):
    N, H, W, C = x_nhwc.shape
    Ho = (H + 2 * padding - ksize) // stride + 1
    Wo = (W + 2 * padding - ksize) // stride + 1
    xp = jnp.pad(x_nhwc, ((0, 0), (padding, padding), (padding, padding), (0, 0)))
    cols = []
    for ki in range(ksize):
        for kj in range(ksize):
            patch = xp[:, ki:ki + (Ho - 1) * stride + 1:stride,
                          kj:kj + (Wo - 1) * stride + 1:stride, :]
            cols.append(patch)
    a = jnp.concatenate(cols, axis=-1)               # (N, Ho, Wo, k*k*C)
    return a.reshape(N * Ho * Wo, ksize * ksize * C), (N, Ho, Wo)


def _conv_w_to_mat(w_oihw):
    # OIHW -> (kh*kw*Cin, Cout), matching im2col's (ki, kj, C) patch ordering
    cout = w_oihw.shape[0]
    return jnp.transpose(w_oihw, (2, 3, 1, 0)).reshape(-1, cout)


def residual_forward(x_nchw, params, use_1x1conv, stride, eps=1e-5):
    x = jnp.transpose(x_nchw, (0, 2, 3, 1)).astype(jnp.float32)   # NCHW -> NHWC
    cin = x.shape[-1]

    # conv1 (+ fused stats) -> bn1 -> relu.  conv1_b is mathematically cancelled
    # by training-mode BN, so it is not fed to the kernel.
    a1, (N, Ho, Wo) = im2col(x, 3, stride, 1)
    y1, mean1, var1 = conv2d_matmul_stats(a1, _conv_w_to_mat(params["conv1_w"]))
    scale1 = params["bn1_gamma"] * jax.lax.rsqrt(var1 + eps)
    shift1 = params["bn1_beta"] - mean1 * scale1
    y1 = bn_relu(y1, scale1, shift1)

    # conv2 (+ fused stats) -> bn2 scale/shift (applied in the final fused kernel)
    a2, _ = im2col(y1.reshape(N, Ho, Wo, -1), 3, 1, 1)
    y2, mean2, var2 = conv2d_matmul_stats(a2, _conv_w_to_mat(params["conv2_w"]))
    scale2 = params["bn2_gamma"] * jax.lax.rsqrt(var2 + eps)
    shift2 = params["bn2_beta"] - mean2 * scale2

    # final fused kernel: bn2 + residual (identity or 1x1-conv projection) + relu
    if use_1x1conv:
        # 1x1 residual conv: pure strided slice + in-kernel matmul (no im2col,
        # projected residual never written to HBM)
        xs = x[:, :(Ho - 1) * stride + 1:stride, :(Wo - 1) * stride + 1:stride, :]
        out = bn_conv_add_relu(y2, scale2, shift2, xs.reshape(-1, cin),
                               _conv_w_to_mat(params["conv3_w"]),
                               params["conv3_b"])
    else:
        out = bn_add_relu(y2, scale2, shift2, x.reshape(-1, cin))

    out = out.reshape(N, Ho, Wo, -1)
    return jnp.transpose(out, (0, 3, 1, 2))                        # NHWC -> NCHW


# ------------------------------ pure-JAX reference --------------------------

def ref_forward(x, p, use_1x1conv, stride, eps=1e-5):
    def conv(x, w, b, s, pad):
        y = jax.lax.conv_general_dilated(
            x, w, (s, s), [(pad, pad), (pad, pad)],
            dimension_numbers=("NCHW", "OIHW", "NCHW"))
        return y + b[None, :, None, None]

    def bn(x, g, bta):
        m = jnp.mean(x, axis=(0, 2, 3), keepdims=True)
        v = jnp.var(x, axis=(0, 2, 3), keepdims=True)
        return (x - m) / jnp.sqrt(v + eps) * g[None, :, None, None] + bta[None, :, None, None]

    y = jax.nn.relu(bn(conv(x, p["conv1_w"], p["conv1_b"], stride, 1),
                       p["bn1_gamma"], p["bn1_beta"]))
    y = bn(conv(y, p["conv2_w"], p["conv2_b"], 1, 1), p["bn2_gamma"], p["bn2_beta"])
    if use_1x1conv:
        x = conv(x, p["conv3_w"], p["conv3_b"], stride, 0)
    return jax.nn.relu(y + x)


# ----------------------------------- main -----------------------------------

def make_params(key, cin, cout, use_1x1conv):
    ks = jax.random.split(key, 10)
    p = {
        "conv1_w": 0.1 * jax.random.normal(ks[0], (cout, cin, 3, 3), jnp.float32),
        "conv1_b": 0.1 * jax.random.normal(ks[1], (cout,), jnp.float32),
        "conv2_w": 0.1 * jax.random.normal(ks[2], (cout, cout, 3, 3), jnp.float32),
        "conv2_b": 0.1 * jax.random.normal(ks[3], (cout,), jnp.float32),
        "bn1_gamma": 1.0 + 0.1 * jax.random.normal(ks[4], (cout,), jnp.float32),
        "bn1_beta": 0.1 * jax.random.normal(ks[5], (cout,), jnp.float32),
        "bn2_gamma": 1.0 + 0.1 * jax.random.normal(ks[6], (cout,), jnp.float32),
        "bn2_beta": 0.1 * jax.random.normal(ks[7], (cout,), jnp.float32),
    }
    if use_1x1conv:
        p["conv3_w"] = 0.1 * jax.random.normal(ks[8], (cout, cin, 1, 1), jnp.float32)
        p["conv3_b"] = 0.1 * jax.random.normal(ks[9], (cout,), jnp.float32)
    return p


if __name__ == "__main__":
    key = jax.random.PRNGKey(0)

    configs = [
        # (B, Cin, Cout, H, W, use_1x1conv, stride)
        (2, 4, 8, 16, 16, True, 2),    # downsampling block with projection
        (2, 8, 8, 16, 16, False, 1),   # identity-residual block
        (2, 4, 8, 20, 20, True, 1),    # M=800: exercises TM=512 tiling + ragged-tail mask
    ]

    for cfg_idx, (B, cin, cout, H, W, use_1x1, stride) in enumerate(configs):
        kp, kx, key = jax.random.split(key, 3)
        params = make_params(kp, cin, cout, use_1x1)
        x = jax.random.normal(kx, (B, cin, H, W), jnp.float32)

        out = jax.block_until_ready(residual_forward(x, params, use_1x1, stride))
        ref = ref_forward(x, params, use_1x1, stride)

        assert out.shape == ref.shape, (cfg_idx, out.shape, ref.shape)
        max_err = float(jnp.max(jnp.abs(out - ref)))
        assert jnp.allclose(out, ref, rtol=1e-4, atol=1e-4), (cfg_idx, max_err)

    print("KERNEL_OK")
</pallas_src>

<mosaic_0001>
module attributes {stable_mosaic.version = 11 : i64} {
  func.func @_conv_stats_kernel(%arg0: i32, %arg1: memref<128x36xf32, #tpu.memory_space<vmem>>, %arg2: memref<36x8xf32, #tpu.memory_space<vmem>>, %arg3: memref<128x8xf32, #tpu.memory_space<vmem>>, %arg4: memref<1x8xf32, #tpu.memory_space<vmem>>, %arg5: memref<1x8xf32, #tpu.memory_space<vmem>>) attributes {dimension_semantics = [#tpu.dimension_semantics<arbitrary>], iteration_bounds = array<i64: 1>, scalar_prefetch = 0 : i64, scratch_operands = 0 : i64, tpu.core_type = #tpu.core_type<tc>, window_params = [{transform_indices = @transform_0, window_bounds = array<i64: 128, 36>}, {pipeline_mode = #tpu.pipeline_mode<synchronous>, transform_indices = @transform_1, window_bounds = array<i64: 36, 8>}, {transform_indices = @transform_2, window_bounds = array<i64: 128, 8>}, {pipeline_mode = #tpu.pipeline_mode<synchronous>, transform_indices = @transform_3, window_bounds = array<i64: 1, 8>}, {pipeline_mode = #tpu.pipeline_mode<synchronous>, transform_indices = @transform_4, window_bounds = array<i64: 1, 8>}]} {
    %c0_i32 = arith.constant 0 : i32
    %0 = arith.cmpi eq, %arg0, %c0_i32 : i32
    %1 = arith.extui %0 : i1 to i32
    %c0_i32_0 = arith.constant 0 : i32
    %2 = arith.cmpi ne, %1, %c0_i32_0 : i32
    scf.if %2 {
      %cst_16 = arith.constant 0.000000e+00 : f32
      %18 = vector.broadcast %cst_16 : f32 to vector<1x8xf32>
      %c0_17 = arith.constant 0 : index
      %c0_18 = arith.constant 0 : index
      %19 = vector.load %arg4[%c0_17, %c0_18] : memref<1x8xf32, #tpu.memory_space<vmem>>, vector<1x8xf32>
      tpu.vector_store %arg4[%c0_17, %c0_18], %18 {strides = array<i32>} : memref<1x8xf32, #tpu.memory_space<vmem>>, vector<1x8xf32>,
      %cst_19 = arith.constant 0.000000e+00 : f32
      %20 = vector.broadcast %cst_19 : f32 to vector<1x8xf32>
      %c0_20 = arith.constant 0 : index
      %c0_21 = arith.constant 0 : index
      %21 = vector.load %arg5[%c0_20, %c0_21] : memref<1x8xf32, #tpu.memory_space<vmem>>, vector<1x8xf32>
      tpu.vector_store %arg5[%c0_20, %c0_21], %20 {strides = array<i32>} : memref<1x8xf32, #tpu.memory_space<vmem>>, vector<1x8xf32>,
    } else {
    }
    %c0 = arith.constant 0 : index
    %c0_1 = arith.constant 0 : index
    %3 = vector.load %arg1[%c0, %c0_1] : memref<128x36xf32, #tpu.memory_space<vmem>>, vector<128x36xf32>
    %c0_2 = arith.constant 0 : index
    %c0_3 = arith.constant 0 : index
    %4 = vector.load %arg2[%c0_2, %c0_3] : memref<36x8xf32, #tpu.memory_space<vmem>>, vector<36x8xf32>
    %cst = arith.constant dense<0.000000e+00> : vector<128x8xf32>
    %5 = tpu.matmul %3, %4, %cst {dimension_numbers = #tpu.dot_dimension_numbers<[1], [0], [0], [1], [0, 0, 1, 1], [], []>} : vector<128x36xf32>, vector<36x8xf32>, vector<128x8xf32> -> vector<128x8xf32>
    %c0_4 = arith.constant 0 : index
    %c0_5 = arith.constant 0 : index
    %6 = vector.load %arg3[%c0_4, %c0_5] : memref<128x8xf32, #tpu.memory_space<vmem>>, vector<128x8xf32>
    tpu.vector_store %arg3[%c0_4, %c0_5], %5 {strides = array<i32>} : memref<128x8xf32, #tpu.memory_space<vmem>>, vector<128x8xf32>,
    %c0_6 = arith.constant 0 : index
    %c0_7 = arith.constant 0 : index
    %7 = vector.load %arg4[%c0_6, %c0_7] : memref<1x8xf32, #tpu.memory_space<vmem>>, vector<1x8xf32>
    %cst_8 = arith.constant dense<0.000000e+00> : vector<8xf32>
    %8 = vector.multi_reduction <add>, %5, %cst_8 [0] : vector<128x8xf32> to vector<8xf32>
    %9 = vector.shape_cast %8 : vector<8xf32> to vector<1x8xf32>
    %10 = arith.addf %7, %9 : vector<1x8xf32>
    %c0_9 = arith.constant 0 : index
    %c0_10 = arith.constant 0 : index
    %11 = vector.load %arg4[%c0_9, %c0_10] : memref<1x8xf32, #tpu.memory_space<vmem>>, vector<1x8xf32>
    tpu.vector_store %arg4[%c0_9, %c0_10], %10 {strides = array<i32>} : memref<1x8xf32, #tpu.memory_space<vmem>>, vector<1x8xf32>,
    %c0_11 = arith.constant 0 : index
    %c0_12 = arith.constant 0 : index
    %12 = vector.load %arg5[%c0_11, %c0_12] : memref<1x8xf32, #tpu.memory_space<vmem>>, vector<1x8xf32>
    %13 = arith.mulf %5, %5 : vector<128x8xf32>
    %cst_13 = arith.constant dense<0.000000e+00> : vector<8xf32>
    %14 = vector.multi_reduction <add>, %13, %cst_13 [0] : vector<128x8xf32> to vector<8xf32>
    %15 = vector.shape_cast %14 : vector<8xf32> to vector<1x8xf32>
    %16 = arith.addf %12, %15 : vector<1x8xf32>
    %c0_14 = arith.constant 0 : index
    %c0_15 = arith.constant 0 : index
    %17 = vector.load %arg5[%c0_14, %c0_15] : memref<1x8xf32, #tpu.memory_space<vmem>>, vector<1x8xf32>
    tpu.vector_store %arg5[%c0_14, %c0_15], %16 {strides = array<i32>} : memref<1x8xf32, #tpu.memory_space<vmem>>, vector<1x8xf32>,
    return
  }
  func.func @transform_0(%arg0: i32) -> (i32, i32) {
    %c0_i32 = arith.constant 0 : i32
    %c0_i32_0 = arith.constant 0 : i32
    return %arg0, %c0_i32 : i32, i32
  }
  func.func @transform_1(%arg0: i32) -> (i32, i32) {
    %c0_i32 = arith.constant 0 : i32
    %c0_i32_0 = arith.constant 0 : i32
    %c0_i32_1 = arith.constant 0 : i32
    return %c0_i32, %c0_i32_0 : i32, i32
  }
  func.func @transform_2(%arg0: i32) -> (i32, i32) {
    %c0_i32 = arith.constant 0 : i32
    %c0_i32_0 = arith.constant 0 : i32
    return %arg0, %c0_i32 : i32, i32
  }
  func.func @transform_3(%arg0: i32) -> (i32, i32) {
    %c0_i32 = arith.constant 0 : i32
    %c0_i32_0 = arith.constant 0 : i32
    %c0_i32_1 = arith.constant 0 : i32
    return %c0_i32, %c0_i32_0 : i32, i32
  }
  func.func @transform_4(%arg0: i32) -> (i32, i32) {
    %c0_i32 = arith.constant 0 : i32
    %c0_i32_0 = arith.constant 0 : i32
    %c0_i32_1 = arith.constant 0 : i32
    return %c0_i32, %c0_i32_0 : i32, i32
  }
}

</mosaic_0001>

<llo_original>
// kernel: tpu_custom_call.1
$region0: #{tpu_custom_call.1}
  #allocation0 [shape = 'u32[]', space=smem, size = 0x4, offset = 0x4, fixed_abs, tag = 'smem constant byte address 0x4 - core index']
  #allocation1 [shape = 'u32[72,128]{1,0:T(1,128)}', space=vmem, size = 0x9000, scoped, tag = 'internal scratch']
  %s0 = inlined_call_operand.vmem [shape: f32[128,36], index: 0, kind: input, shape index: {}]
  %s1 = inlined_call_operand.vmem [shape: f32[36,8], index: 1, kind: input, shape index: {}]
  %s2 = inlined_call_operand.vmem [shape: f32[128,8], index: 2, kind: output, shape index: {0}]
  %s3 = inlined_call_operand.hbm [shape: f32[1,8], index: 3, kind: output, shape index: {1}]
  %s4 = inlined_call_operand.hbm [shape: f32[1,8], index: 4, kind: output, shape index: {2}]
  %5 = xla_tuple %s2, %s3, %s4
  %s6 = sld [smem:[#allocation0]]
  $region38: #{tpu_custom_call.1} parent=0
    _
  %s8 = ssub.s32 1, %s6
  %s9 = scalar_select 0, %s8, %s6
  $region1: #{tpu_custom_call.1} parent=0
    #allocation2 [shape = 'u8[512]{0}', space=vmem, size = 0x400, scoped, tag = 'output window, operand 1, single buffered']
    #allocation3 [shape = 's32[1]{0}', space=sflag, size = 0x4, scoped, tag = 'scoped memory for tpu_custom_call.1']
    #allocation4 [shape = 'u8[512]{0}', space=vmem, size = 0x400, scoped, tag = 'output window, operand 2, single buffered']
    #allocation5 [shape = 's32[1]{0}', space=sflag, size = 0x4, scoped, tag = 'scoped memory for tpu_custom_call.1']
    %10 = vsyncpa [#allocation3], 0
    %11 = vsyncpa [#allocation5], 0
    // Predicated region
    $region2: #{tpu_custom_call.1} parent=1 // pred_check
      _
    $region3: #{tpu_custom_call.1} parent=1 // pred_check_branch
      %13 = sbr.rel (0) target = $region5
    $region4: #{tpu_custom_call.1} parent=1 // pred_region
      _
    $region5: #{tpu_custom_call.1} parent=1 // pred_fallthru
      _
    // Predicated region
    $region6: #{tpu_custom_call.1} parent=1 // pred_check
      _
    $region7: #{tpu_custom_call.1} parent=1 // pred_check_branch
      %15 = sbr.rel (0) target = $region9
    $region8: #{tpu_custom_call.1} parent=1 // pred_region
      _
    $region9: #{tpu_custom_call.1} parent=1 // pred_fallthru
      _
    %p16 = scmp.eq.s32.totalorder 0, 0
    // Predicated region
    $region10: #{tpu_custom_call.1} parent=1 // pred_check
      %p17 = pneg %p16
    $region11: #{tpu_custom_call.1} parent=1 // pred_check_branch
      %19 = sbr.rel (%p17) target = $region13
    $region12: #{tpu_custom_call.1} parent=1 // pred_region
      %vm20 = vcmask 57344
      %21 = vst.msk [vmem:[#allocation2] sm:$0x1] %vm20, 0.0
      %22 = vst.msk [vmem:[#allocation4] sm:$0x1] %vm20, 0.0
    $region13: #{tpu_custom_call.1} parent=1 // pred_fallthru
      _
    %v23 = vld [vmem:[%s0] sm:$0xff]
    %v24 = vld [vmem:[%s0 + $0x8] sm:$0xff]
    %v25 = vld [vmem:[%s0 + $0x10] sm:$0xff]
    %v26 = vld [vmem:[%s0 + $0x18] sm:$0xff]
    %v27 = vld [vmem:[%s0 + $0x20] sm:$0xff]
    %v28 = vld [vmem:[%s0 + $0x28] sm:$0xff]
    %v29 = vld [vmem:[%s0 + $0x30] sm:$0xff]
    %v30 = vld [vmem:[%s0 + $0x38] sm:$0xff]
    %v31 = vld [vmem:[%s0 + $0x40] sm:$0xff]
    %v32 = vld [vmem:[%s0 + $0x48] sm:$0xff]
    %v33 = vld [vmem:[%s0 + $0x50] sm:$0xff]
    %v34 = vld [vmem:[%s0 + $0x58] sm:$0xff]
    %v35 = vld [vmem:[%s0 + $0x60] sm:$0xff]
    %v36 = vld [vmem:[%s0 + $0x68] sm:$0xff]
    %v37 = vld [vmem:[%s0 + $0x70] sm:$0xff]
    %v38 = vld [vmem:[%s0 + $0x78] sm:$0xff]
    %v39 = vld [vmem:[%s1] sm:$0xff]
    %v40 = vld [vmem:[%s1 + $0x8] sm:$0xff]
    %v41 = vld [vmem:[%s1 + $0x10] sm:$0xff]
    %v42 = vld [vmem:[%s1 + $0x18] sm:$0xff]
    %v43 = vld [vmem:[%s1 + $0x20] sm:$0xf]
    %vm44 = vcmask 293888
    %v46 = vsel %vm44, %v23, 0
    %v49 = vsel %vm44, %v24, 0
    %v52 = vsel %vm44, %v25, 0
    %v55 = vsel %vm44, %v26, 0
    %v58 = vsel %vm44, %v27, 0
    %v61 = vsel %vm44, %v28, 0
    %v64 = vsel %vm44, %v29, 0
    %v67 = vsel %vm44, %v30, 0
    %v70 = vsel %vm44, %v31, 0
    %v73 = vsel %vm44, %v32, 0
    %v76 = vsel %vm44, %v33, 0
    %v79 = vsel %vm44, %v34, 0
    %v82 = vsel %vm44, %v35, 0
    %v85 = vsel %vm44, %v36, 0
    %v88 = vsel %vm44, %v37, 0
    %v91 = vsel %vm44, %v38, 0
    %vm93 = vcmask 1043456
    %v95 = vsel %vm93, %v43, 0
    %97 = vmatpush.msra.mxu0 0.0
    %98 = vmatpush.msra.mxu0 0.0
    %99 = vmatpush.msra.mxu0 0.0
    %100 = vmatpush.msra.mxu0 0.0
    %101 = vmatpush.msra.mxu0 0.0
    %102 = vmatpush.msra.mxu0 0.0
    %103 = vmatpush.msra.mxu0 0.0
    %104 = vmatpush.msra.mxu0 0.0
    %105 = vmatpush.msra.mxu0 0.0
    %106 = vmatpush.msra.mxu0 0.0
    %107 = vmatpush.msra.mxu0 0.0
    %108 = vmatpush.msra.mxu0 %v95
    %109 = vmatpush.msra.mxu0 %v42
    %110 = vmatpush.msra.mxu0 %v41
    %111 = vmatpush.msra.mxu0 %v40
    %112 = vmatpush.msra.mxu0 %v39
    %113 = vmatmul.f32.gmra.mxu0 %v46
    %v114 = vpop.f32.mrf.mxu0
    %v115 = vadd.f32 0.0, %v114
    %116 = vmatmul.f32.gmra.mxu0 %v49
    %v117 = vpop.f32.mrf.mxu0
    %v118 = vadd.f32 0.0, %v117
    %119 = vmatmul.f32.gmra.mxu0 %v52
    %v120 = vpop.f32.mrf.mxu0
    %v121 = vadd.f32 0.0, %v120
    %122 = vmatmul.f32.gmra.mxu0 %v55
    %v123 = vpop.f32.mrf.mxu0
    %v124 = vadd.f32 0.0, %v123
    %125 = vmatmul.f32.gmra.mxu0 %v58
    %v126 = vpop.f32.mrf.mxu0
    %v127 = vadd.f32 0.0, %v126
    %128 = vmatmul.f32.gmra.mxu0 %v61
    %v129 = vpop.f32.mrf.mxu0
    %v130 = vadd.f32 0.0, %v129
    %131 = vmatmul.f32.gmra.mxu0 %v64
    %v132 = vpop.f32.mrf.mxu0
    %v133 = vadd.f32 0.0, %v132
    %134 = vmatmul.f32.gmra.mxu0 %v67
    %v135 = vpop.f32.mrf.mxu0
    %v136 = vadd.f32 0.0, %v135
    %137 = vmatmul.f32.gmra.mxu0 %v70
    %v138 = vpop.f32.mrf.mxu0
    %v139 = vadd.f32 0.0, %v138
    %140 = vmatmul.f32.gmra.mxu0 %v73
    %v141 = vpop.f32.mrf.mxu0
    %v142 = vadd.f32 0.0, %v141
    %143 = vmatmul.f32.gmra.mxu0 %v76
    %v144 = vpop.f32.mrf.mxu0
    %v145 = vadd.f32 0.0, %v144
    %146 = vmatmul.f32.gmra.mxu0 %v79
    %v147 = vpop.f32.mrf.mxu0
    %v148 = vadd.f32 0.0, %v147
    %149 = vmatmul.f32.gmra.mxu0 %v82
    %v150 = vpop.f32.mrf.mxu0
    %v151 = vadd.f32 0.0, %v150
    %152 = vmatmul.f32.gmra.mxu0 %v85
    %v153 = vpop.f32.mrf.mxu0
    %v154 = vadd.f32 0.0, %v153
    %155 = vmatmul.f32.gmra.mxu0 %v88
    %v156 = vpop.f32.mrf.mxu0
    %v157 = vadd.f32 0.0, %v156
    %158 = vmatmul.f32.gmra.mxu0 %v91
    %v159 = vpop.f32.mrf.mxu0
    %v160 = vadd.f32 0.0, %v159
    %161 = vdwg.mxu0
    %vm162 = vcmask 64512
    %163 = vst.msk [vmem:[%s2] sm:$0xff] %vm162, %v115
    %164 = vst.msk [vmem:[%s2 + $0x8] sm:$0xff] %vm162, %v118
    %165 = vst.msk [vmem:[%s2 + $0x10] sm:$0xff] %vm162, %v121
    %166 = vst.msk [vmem:[%s2 + $0x18] sm:$0xff] %vm162, %v124
    %167 = vst.msk [vmem:[%s2 + $0x20] sm:$0xff] %vm162, %v127
    %168 = vst.msk [vmem:[%s2 + $0x28] sm:$0xff] %vm162, %v130
    %169 = vst.msk [vmem:[%s2 + $0x30] sm:$0xff] %vm162, %v133
    %170 = vst.msk [vmem:[%s2 + $0x38] sm:$0xff] %vm162, %v136
    %171 = vst.msk [vmem:[%s2 + $0x40] sm:$0xff] %vm162, %v139
    %172 = vst.msk [vmem:[%s2 + $0x48] sm:$0xff] %vm162, %v142
    %173 = vst.msk [vmem:[%s2 + $0x50] sm:$0xff] %vm162, %v145
    %174 = vst.msk [vmem:[%s2 + $0x58] sm:$0xff] %vm162, %v148
    %175 = vst.msk [vmem:[%s2 + $0x60] sm:$0xff] %vm162, %v151
    %176 = vst.msk [vmem:[%s2 + $0x68] sm:$0xff] %vm162, %v154
    %177 = vst.msk [vmem:[%s2 + $0x70] sm:$0xff] %vm162, %v157
    %178 = vst.msk [vmem:[%s2 + $0x78] sm:$0xff] %vm162, %v160
    %v179 = vld [vmem:[#allocation2] sm:$0x1]
    %v180 = vsel %vm162, %v115, 0.0
    %v181 = vsel %vm162, %v118, 0.0
    %v182 = vadd.f32 %v180, %v181
    %v183 = vsel %vm162, %v121, 0.0
    %v184 = vadd.f32 %v182, %v183
    %v185 = vsel %vm162, %v124, 0.0
    %v186 = vadd.f32 %v184, %v185
    %v187 = vsel %vm162, %v127, 0.0
    %v188 = vadd.f32 %v186, %v187
    %v189 = vsel %vm162, %v130, 0.0
    %v190 = vadd.f32 %v188, %v189
    %v191 = vsel %vm162, %v133, 0.0
    %v192 = vadd.f32 %v190, %v191
    %v193 = vsel %vm162, %v136, 0.0
    %v194 = vadd.f32 %v192, %v193
    %v195 = vsel %vm162, %v139, 0.0
    %v196 = vadd.f32 %v194, %v195
    %v197 = vsel %vm162, %v142, 0.0
    %v198 = vadd.f32 %v196, %v197
    %v199 = vsel %vm162, %v145, 0.0
    %v200 = vadd.f32 %v198, %v199
    %v201 = vsel %vm162, %v148, 0.0
    %v202 = vadd.f32 %v200, %v201
    %v203 = vsel %vm162, %v151, 0.0
    %v204 = vadd.f32 %v202, %v203
    %v205 = vsel %vm162, %v154, 0.0
    %v206 = vadd.f32 %v204, %v205
    %v207 = vsel %vm162, %v157, 0.0
    %v208 = vadd.f32 %v206, %v207
    %v209 = vsel %vm162, %v160, 0.0
    %v210 = vadd.f32 %v208, %v209
    %v211 = vrot.slane %v210, 4
    %v212 = vadd.f32 %v210, %v211
    %v213 = vrot.slane %v212, 2
    %v214 = vadd.f32 %v212, %v213
    %v215 = vrot.slane %v214, 1
    %v216 = vadd.f32 %v214, %v215
    %v217 = vadd.f32 %v179, %v216
    %vm218 = vcmask 57344
    %219 = vst.msk [vmem:[#allocation2] sm:$0x1] %vm218, %v217
    %v220 = vld [vmem:[#allocation4] sm:$0x1]
    %v221 = vmul.f32 %v115, %v115
    %v222 = vmul.f32 %v118, %v118
    %v223 = vmul.f32 %v121, %v121
    %v224 = vmul.f32 %v124, %v124
    %v225 = vmul.f32 %v127, %v127
    %v226 = vmul.f32 %v130, %v130
    %v227 = vmul.f32 %v133, %v133
    %v228 = vmul.f32 %v136, %v136
    %v229 = vmul.f32 %v139, %v139
    %v230 = vmul.f32 %v142, %v142
    %v231 = vmul.f32 %v145, %v145
    %v232 = vmul.f32 %v148, %v148
    %v233 = vmul.f32 %v151, %v151
    %v234 = vmul.f32 %v154, %v154
    %v235 = vmul.f32 %v157, %v157
    %v236 = vmul.f32 %v160, %v160
    %v237 = vsel %vm162, %v221, 0.0
    %v238 = vsel %vm162, %v222, 0.0
    %v239 = vadd.f32 %v237, %v238
    %v240 = vsel %vm162, %v223, 0.0
    %v241 = vadd.f32 %v239, %v240
    %v242 = vsel %vm162, %v224, 0.0
    %v243 = vadd.f32 %v241, %v242
    %v244 = vsel %vm162, %v225, 0.0
    %v245 = vadd.f32 %v243, %v244
    %v246 = vsel %vm162, %v226, 0.0
    %v247 = vadd.f32 %v245, %v246
    %v248 = vsel %vm162, %v227, 0.0
    %v249 = vadd.f32 %v247, %v248
    %v250 = vsel %vm162, %v228, 0.0
    %v251 = vadd.f32 %v249, %v250
    %v252 = vsel %vm162, %v229, 0.0
    %v253 = vadd.f32 %v251, %v252
    %v254 = vsel %vm162, %v230, 0.0
    %v255 = vadd.f32 %v253, %v254
    %v256 = vsel %vm162, %v231, 0.0
    %v257 = vadd.f32 %v255, %v256
    %v258 = vsel %vm162, %v232, 0.0
    %v259 = vadd.f32 %v257, %v258
    %v260 = vsel %vm162, %v233, 0.0
    %v261 = vadd.f32 %v259, %v260
    %v262 = vsel %vm162, %v234, 0.0
    %v263 = vadd.f32 %v261, %v262
    %v264 = vsel %vm162, %v235, 0.0
    %v265 = vadd.f32 %v263, %v264
    %v266 = vsel %vm162, %v236, 0.0
    %v267 = vadd.f32 %v265, %v266
    %v268 = vrot.slane %v267, 4
    %v269 = vadd.f32 %v267, %v268
    %v270 = vrot.slane %v269, 2
    %v271 = vadd.f32 %v269, %v270
    %v272 = vrot.slane %v271, 1
    %v273 = vadd.f32 %v271, %v272
    %v274 = vadd.f32 %v220, %v273
    %275 = vst.msk [vmem:[#allocation4] sm:$0x1] %vm218, %v274
    // Predicated region
    $region14: #{tpu_custom_call.1} parent=1 // pred_check
      _
    $region15: #{tpu_custom_call.1} parent=1 // pred_check_branch
      %277 = sbr.rel (0) target = $region17
    $region16: #{tpu_custom_call.1} parent=1 // pred_region
      _
    $region17: #{tpu_custom_call.1} parent=1 // pred_fallthru
      _
    // Predicated region
    $region18: #{tpu_custom_call.1} parent=1 // pred_check
      _
    $region19: #{tpu_custom_call.1} parent=1 // pred_check_branch
      %279 = sbr.rel (0) target = $region21
    $region20: #{tpu_custom_call.1} parent=1 // pred_region
      %281 = vsyncadd [#allocation3], 0
      %s283 = sshll.u32 [#allocation2], 4
      %s284 = int_to_ptr.vmem [resolvable:$true] %s283
      %s285 = sshll.u32 %s3, 4
      %s286 = int_to_ptr.hbm [resolvable:$true] %s285
      %288 = dma.vmem_to_hbm [thread:$0]  %s284, 16, %s286, [#allocation3]
    $region21: #{tpu_custom_call.1} parent=1 // pred_fallthru
      _
    // Predicated region
    $region22: #{tpu_custom_call.1} parent=1 // pred_check
      _
    $region23: #{tpu_custom_call.1} parent=1 // pred_check_branch
      %290 = sbr.rel (0) target = $region25
    $region24: #{tpu_custom_call.1} parent=1 // pred_region
      %292 = vsyncadd [#allocation5], 0
      %s294 = sshll.u32 [#allocation4], 4
      %s295 = int_to_ptr.vmem [resolvable:$true] %s294
      %s296 = sshll.u32 %s4, 4
      %s297 = int_to_ptr.hbm [resolvable:$true] %s296
      %299 = dma.vmem_to_hbm [thread:$0]  %s295, 16, %s297, [#allocation5]
    $region25: #{tpu_custom_call.1} parent=1 // pred_fallthru
      _
    // Predicated region
    $region26: #{tpu_custom_call.1} parent=1 // pred_check
      _
    $region27: #{tpu_custom_call.1} parent=1 // pred_check_branch
      %301 = sbr.rel (0) target = $region29
    $region28: #{tpu_custom_call.1} parent=1 // pred_region
      _
    $region29: #{tpu_custom_call.1} parent=1 // pred_fallthru
      _
    // Predicated region
    $region30: #{tpu_custom_call.1} parent=1 // pred_check
      _
    $region31: #{tpu_custom_call.1} parent=1 // pred_check_branch
      %303 = sbr.rel (0) target = $region33
    $region32: #{tpu_custom_call.1} parent=1 // pred_region
      %305 = dma.done [#allocation3], 16
    $region33: #{tpu_custom_call.1} parent=1 // pred_fallthru
      _
    // Predicated region
    $region34: #{tpu_custom_call.1} parent=1 // pred_check
      _
    $region35: #{tpu_custom_call.1} parent=1 // pred_check_branch
      %307 = sbr.rel (0) target = $region37
    $region36: #{tpu_custom_call.1} parent=1 // pred_region
      %309 = dma.done [#allocation5], 16
    $region37: #{tpu_custom_call.1} parent=1 // pred_fallthru
      _
    %310 = vsyncpa [#allocation3], 1
    %311 = vsyncpa [#allocation5], 1

</llo_original>
